<compile_context>
chip_gen: v7x
topology: tpu7x:2x2x1
jax: 0.10.0
libtpu: 0.0.40
codegen_flags: <defaults>
</compile_context>

<pallas_src>
import jax
import jax.numpy as jnp
from jax.experimental import pallas as pl
from jax.experimental.pallas import tpu as pltpu


def _classifier_kernel(x_ref, w_ref, b_ref, o_ref):
    # x_ref: (1, C_in, T_hw)  w_ref: (T_co, C_in)  b_ref: (T_co, 1) f32
    # o_ref: (1, T_co, T_hw)
    # In-kernel cast of the x tile to the weight dtype (no-op on the f32 path,
    # bf16 MXU path when use_bf16=True) -- avoids a wrapper-side HBM cast pass.
    x = x_ref[0].astype(w_ref.dtype)                                  # (C_in, T_hw)
    y = jnp.dot(w_ref[...], x, preferred_element_type=jnp.float32)    # MXU, f32 acc
    y = y + b_ref[...]                                                # bias in f32
    o_ref[0] = y.astype(o_ref.dtype)


def _tpu_specs():
    """(vmem_capacity_bytes, is_multi_tensorcore_chip) with safe fallbacks."""
    capacity = 64 * 1024 * 1024      # conservative default (v7x per-TC VMEM)
    try:
        info = pltpu.get_tpu_info()
        cap = int(getattr(info, "vmem_capacity_bytes", 0) or 0)
        if cap > 0:
            capacity = cap
    except Exception:
        pass
    kind = ""
    try:
        kind = str(jax.devices()[0].device_kind).lower()
    except Exception:
        pass
    multi_core = "v7" in kind
    if multi_core:
        # Guard against per-chip (vs per-TensorCore) reporting on 2-TC parts.
        capacity = min(capacity, 64 * 1024 * 1024)
    return capacity, multi_core


def _choose_co_tile(c_out, c_in, w_bytes, w_budget):
    """Full C_out if the weight block fits its budget, else a multiple of 8."""
    if c_out <= 8 or c_out * c_in * w_bytes <= w_budget:
        return c_out
    t = (w_budget // max(1, c_in * w_bytes)) // 8 * 8
    return int(max(8, min(t, c_out)))


def _choose_hw_tile(hw, n_batch, c_in, t_co, x_bytes, out_bytes, budget, multi_core):
    """Largest lane-dense (multiple-of-128) HW tile whose double-buffered
    x/out tiles fit `budget`.  For hw < 128 the block spans the full dim
    (allowed by the (8,128) rule) and the single store is masked."""
    if hw <= 128:
        return hw
    hw_floor = (hw // 128) * 128                       # keep block <= array dim
    per_lane = 2 * (c_in * x_bytes + t_co * out_bytes)  # double-buffered x + out
    t = (budget // max(1, per_lane)) // 128 * 128
    t = int(max(128, min(t, 32768, hw_floor)))
    # Only split a single full-HW tile when two TensorCores can actually use it
    # (v7x).  On single-TC v5e/v6e the grid is a serial loop and splitting just
    # adds a ~0.35 us step + an extra DMA pair.
    if multi_core and n_batch < 2 and t >= hw and hw_floor >= 256:
        t = int(max(128, ((hw_floor // 2) // 128) * 128))
    return t


def classifier_forward(x_nchw, weight, bias, *, use_bf16=False):
    """x_nchw: (N, C_in, H, W); weight: (C_out, C_in); bias: (C_out,).
    Returns (N, C_out*H*W), matching PyTorch's `conv(x).view(N, -1)` order."""
    N, C_in, H, W = x_nchw.shape
    C_out = weight.shape[0]
    HW = H * W
    out_dtype = x_nchw.dtype

    w_dtype = jnp.bfloat16 if use_bf16 else x_nchw.dtype
    x_bytes = jnp.dtype(x_nchw.dtype).itemsize
    w_bytes = jnp.dtype(w_dtype).itemsize
    out_bytes = jnp.dtype(out_dtype).itemsize

    vmem_capacity, multi_core = _tpu_specs()
    # Generation-aware budgets: ~24 MiB of double-buffered x/out tiles on
    # 128-MiB-VMEM parts (v5e/v6e), ~16 MiB on 64-MiB-per-TC v7x.
    tile_budget = min(24 * 1024 * 1024, vmem_capacity // 4)
    w_budget = min(8 * 1024 * 1024, vmem_capacity // 16)

    T_co = _choose_co_tile(C_out, C_in, w_bytes, w_budget)
    T_hw = _choose_hw_tile(HW, N, C_in, T_co, x_bytes, out_bytes,
                           tile_budget, multi_core)
    n_hw = pl.cdiv(HW, T_hw)     # ragged trailing tile handled by masked stores
    n_co = pl.cdiv(C_out, T_co)

    x3 = x_nchw.reshape(N, C_in, HW)                   # view, no HBM pass
    w = weight.astype(w_dtype)                          # tiny; cast in wrapper
    b2 = bias.astype(jnp.float32).reshape(C_out, 1)     # bias add stays f32

    # VMEM accounting: double-buffered x/out tiles + double-buffered (but
    # grid-invariant unless C_out is tiled) weight/bias blocks, with margin.
    need = (2 * (C_in * T_hw * x_bytes + T_co * T_hw * out_bytes)
            + 2 * (T_co * C_in * w_bytes + T_co * 4))
    vmem_limit = int(min(max(16 * 1024 * 1024, 2 * need),
                         int(0.6 * vmem_capacity)))

    cost = pl.CostEstimate(
        flops=2 * N * C_out * C_in * HW,
        transcendentals=0,
        bytes_accessed=(N * C_in * HW * x_bytes
                        + C_out * C_in * w_bytes + C_out * 4
                        + N * C_out * HW * out_bytes),
    )

    grid_spec = pltpu.PrefetchScalarGridSpec(
        num_scalar_prefetch=0,
        # hw outermost (megacore shards it on v7x), batch next, C_out-tile
        # innermost so the x tile is reused across C_out tiles.
        grid=(n_hw, N, n_co),
        in_specs=[
            pl.BlockSpec((1, C_in, T_hw), lambda h, n, c: (n, 0, h)),
            pl.BlockSpec((T_co, C_in), lambda h, n, c: (c, 0)),
            pl.BlockSpec((T_co, 1), lambda h, n, c: (c, 0)),
        ],
        out_specs=pl.BlockSpec((1, T_co, T_hw), lambda h, n, c: (n, c, h)),
    )

    out3 = pl.pallas_call(
        _classifier_kernel,
        out_shape=jax.ShapeDtypeStruct((N, C_out, HW), out_dtype),
        grid_spec=grid_spec,
        compiler_params=pltpu.CompilerParams(
            dimension_semantics=("parallel", "parallel", "parallel"),
            vmem_limit_bytes=vmem_limit,
        ),
        cost_estimate=cost,
    )(x3, w, b2)

    # x.view(N, -1) on NCHW output == reshape of (N, C_out, H*W); no slicing.
    return out3.reshape(N, C_out * HW)


def init_params(key, in_channels, num_classes, dtype=jnp.float32):
    # Xavier-normal weight (gain=1.0) for a 1x1 conv:
    # std = sqrt(2 / (fan_in + fan_out)).
    kw, kb = jax.random.split(key)
    std = (2.0 / (in_channels + num_classes)) ** 0.5
    weight = std * jax.random.normal(kw, (num_classes, in_channels), dtype)
    # PyTorch Conv2d default bias init: U(-1/sqrt(fan_in), 1/sqrt(fan_in))
    bound = 1.0 / (in_channels ** 0.5)
    bias = jax.random.uniform(kb, (num_classes,), dtype, -bound, bound)
    return weight, bias


if __name__ == "__main__":
    key = jax.random.PRNGKey(0)
    k_x, k_p, k_x2 = jax.random.split(key, 3)

    N, C_in, H, W = 2, 4, 16, 16
    num_classes = 8

    x = jax.random.normal(k_x, (N, C_in, H, W), jnp.float32)
    weight, bias = init_params(k_p, C_in, num_classes)

    # f32 path.
    out = classifier_forward(x, weight, bias)
    jax.block_until_ready(out)
    ref = jnp.einsum("oc,nchw->nohw", weight, x) + bias[None, :, None, None]
    ref = ref.reshape(N, -1)
    assert out.shape == (N, num_classes * H * W)
    assert jnp.allclose(out, ref, atol=1e-5, rtol=1e-5)

    # Non-128-multiple spatial size exercises the masked / partial-lane path
    # (no wrapper pad, no output slice).
    x_odd = jax.random.normal(k_x2, (N, C_in, 7, 7), jnp.float32)
    out_odd = classifier_forward(x_odd, weight, bias)
    jax.block_until_ready(out_odd)
    ref_odd = (jnp.einsum("oc,nchw->nohw", weight, x_odd)
               + bias[None, :, None, None]).reshape(N, -1)
    assert out_odd.shape == (N, num_classes * 7 * 7)
    assert jnp.allclose(out_odd, ref_odd, atol=1e-5, rtol=1e-5)

    # bf16 MXU path (in-kernel cast of the x tile; W/bias cast in wrapper).
    out_bf16 = classifier_forward(x, weight, bias, use_bf16=True)
    jax.block_until_ready(out_bf16)
    assert jnp.allclose(out_bf16, ref, atol=5e-2, rtol=5e-2)

    print("KERNEL_OK")
</pallas_src>

<mosaic_0001>
module attributes {stable_mosaic.version = 11 : i64} {
  func.func @_classifier_kernel(%arg0: i32, %arg1: i32, %arg2: i32, %arg3: memref<1x4x256xf32, #tpu.memory_space<vmem>>, %arg4: memref<8x4xf32, #tpu.memory_space<vmem>>, %arg5: memref<8x1xf32, #tpu.memory_space<vmem>>, %arg6: memref<1x8x256xf32, #tpu.memory_space<vmem>>) attributes {dimension_semantics = [#tpu.dimension_semantics<parallel>, #tpu.dimension_semantics<parallel>, #tpu.dimension_semantics<parallel>], iteration_bounds = array<i64: 1, 2, 1>, scalar_prefetch = 0 : i64, scratch_operands = 0 : i64, tpu.core_type = #tpu.core_type<tc>, window_params = [{transform_indices = @transform_0, window_bounds = array<i64: 1, 4, 256>}, {transform_indices = @transform_1, window_bounds = array<i64: 8, 4>}, {transform_indices = @transform_2, window_bounds = array<i64: 8, 1>}, {transform_indices = @transform_3, window_bounds = array<i64: 1, 8, 256>}]} {
    %c0 = arith.constant 0 : index
    %c0_0 = arith.constant 0 : index
    %c0_1 = arith.constant 0 : index
    %0 = vector.load %arg3[%c0, %c0_0, %c0_1] : memref<1x4x256xf32, #tpu.memory_space<vmem>>, vector<1x4x256xf32>
    %1 = vector.shape_cast %0 : vector<1x4x256xf32> to vector<4x256xf32>
    %c0_2 = arith.constant 0 : index
    %c0_3 = arith.constant 0 : index
    %2 = vector.load %arg4[%c0_2, %c0_3] : memref<8x4xf32, #tpu.memory_space<vmem>>, vector<8x4xf32>
    %cst = arith.constant dense<0.000000e+00> : vector<8x256xf32>
    %3 = tpu.matmul %2, %1, %cst {dimension_numbers = #tpu.dot_dimension_numbers<[1], [0], [0], [1], [0, 0, 1, 1], [], []>} : vector<8x4xf32>, vector<4x256xf32>, vector<8x256xf32> -> vector<8x256xf32>
    %c0_4 = arith.constant 0 : index
    %c0_5 = arith.constant 0 : index
    %4 = vector.load %arg5[%c0_4, %c0_5] : memref<8x1xf32, #tpu.memory_space<vmem>>, vector<8x1xf32>
    %5 = vector.broadcast %4 : vector<8x1xf32> to vector<8x256xf32>
    %6 = arith.addf %3, %5 : vector<8x256xf32>
    %c0_6 = arith.constant 0 : index
    %c0_7 = arith.constant 0 : index
    %c0_8 = arith.constant 0 : index
    %7 = vector.load %arg6[%c0_6, %c0_7, %c0_8] : memref<1x8x256xf32, #tpu.memory_space<vmem>>, vector<1x8x256xf32>
    %8 = vector.shape_cast %7 : vector<1x8x256xf32> to vector<8x256xf32>
    %9 = vector.shape_cast %6 : vector<8x256xf32> to vector<1x8x256xf32>
    tpu.vector_store %arg6[%c0_6, %c0_7, %c0_8], %9 {strides = array<i32>} : memref<1x8x256xf32, #tpu.memory_space<vmem>>, vector<1x8x256xf32>,
    return
  }
  func.func @transform_0(%arg0: i32, %arg1: i32, %arg2: i32) -> (i32, i32, i32) {
    %c0_i32 = arith.constant 0 : i32
    %c0_i32_0 = arith.constant 0 : i32
    return %arg1, %c0_i32, %arg0 : i32, i32, i32
  }
  func.func @transform_1(%arg0: i32, %arg1: i32, %arg2: i32) -> (i32, i32) {
    %c0_i32 = arith.constant 0 : i32
    %c0_i32_0 = arith.constant 0 : i32
    return %arg2, %c0_i32 : i32, i32
  }
  func.func @transform_2(%arg0: i32, %arg1: i32, %arg2: i32) -> (i32, i32) {
    %c0_i32 = arith.constant 0 : i32
    %c0_i32_0 = arith.constant 0 : i32
    return %arg2, %c0_i32 : i32, i32
  }
  func.func @transform_3(%arg0: i32, %arg1: i32, %arg2: i32) -> (i32, i32, i32) {
    %c0_i32 = arith.constant 0 : i32
    return %arg1, %arg2, %arg0 : i32, i32, i32
  }
}

</mosaic_0001>

<llo_original>
// kernel: tpu_custom_call.1
$region0: #{tpu_custom_call.1}
  #allocation0 [shape = 'u32[]', space=smem, size = 0x4, offset = 0x4, fixed_abs, tag = 'smem constant byte address 0x4 - core index']
  #allocation1 [shape = 'u32[144,128]{1,0:T(1,128)}', space=vmem, size = 0x12000, scoped, tag = 'internal scratch']
  %s0 = inlined_call_operand.vmem [shape: f32[2,4,256], index: 0, kind: input, shape index: {}]
  %s1 = inlined_call_operand.vmem [shape: f32[8,4], index: 1, kind: input, shape index: {}]
  %s2 = inlined_call_operand.vmem [shape: f32[8,1], index: 2, kind: input, shape index: {}]
  %s3 = inlined_call_operand.hbm [shape: f32[2,8,256], index: 3, kind: output, shape index: {}]
  %s4 = sld [smem:[#allocation0]]
  $region45: #{tpu_custom_call.1} parent=0
    _
  %s6 = ssub.s32 1, %s4
  %s7 = scalar_select 0, %s6, %s4
  $region1: #{tpu_custom_call.1} parent=0
    #allocation2 [shape = 'u8[16384]{0}', space=vmem, size = 0x4000, scoped, tag = 'output window, operand 0']
    #allocation3 [shape = 's32[2]{0}', space=sflag, size = 0x8, scoped, tag = 'scoped memory for tpu_custom_call.1']
    %8 = vsyncpa [#allocation3], 0
    %s9 = scalar_lea.sflag [#allocation3], 1
    %10 = vsyncpa %s9, 0
    loop: start=0, step=1, limit=4
    $region2: #{tpu_custom_call.1} parent=1 // loop_pre_header
      _
    $region3: #{tpu_custom_call.1} parent=1 // loop_header
      %s12 = sphi 0, %s16
      %p13 = scmp.ge.s32.totalorder %s12, 4
      %s19 = sphi 0, %s38
      %s20 = sphi 0, %s34
      %s21 = sphi 0, %s30
      %s22 = sphi 0, %s19
      %s23 = sphi 0, %s20
      %s24 = sphi 0, %s21
      %s25 = sphi 0, %s22
      %s26 = sphi 0, %s23
      %s27 = sphi 0, %s24
      %s43 = sphi 0, %s45
      %s46 = sphi 0, %s43
      %s47 = sphi 0, %s46
      %s63 = sphi 0, %s47
      %s69 = sphi 0, %s71
      %s72 = sphi 0, %s69
      %s73 = sphi 0, %s72
      %s89 = sphi 0, %s73
      %s95 = sphi 0, %s97
      %s98 = sphi 0, %s95
      %s99 = sphi 0, %s98
      %s115 = sphi 0, %s99
      %s125 = sphi 0, %s127
      %s128 = sphi 0, %s125
      %s129 = sphi 0, %s128
      %s145 = sphi 0, %s129
    $region4: #{tpu_custom_call.1} parent=1 // loop_header_branch
      %15 = sbr.rel (%p13) target = $region8
    $region5: #{tpu_custom_call.1} parent=1 // loop_body
      %s17 = ssub.s32 %s12, 1
      %s18 = ssub.s32 %s12, 2
      %s28 = sadd.s32 1, %s21
      %p29 = scmp.ge.s32.totalorder %s28, 1
      %s30 = scalar_select %p29, 0, %s28
      %s31 = sadd.s32 1, %s20
      %s32 = scalar_select %p29, %s31, %s20
      %p33 = scmp.ge.s32.totalorder %s32, 2
      %s34 = scalar_select %p33, 0, %s32
      %s35 = sadd.s32 1, %s19
      %s36 = scalar_select %p33, %s35, %s19
      %p37 = scmp.ge.s32.totalorder %s36, 1
      %s38 = scalar_select %p37, 0, %s36
      %s39 = ssub.s32 %s20, %s34
      %s40 = ssub.s32 %s19, %s38
      %s41 = sor.u32 %s39, %s40
      %p42 = scmp.eq.s32.totalorder %s41, 0
      %s44 = sadd.s32 %s43, 1
      %s45 = scalar_select %p42, %s43, %s44
      %p48 = pneg %p42
      %p49 = scmp.eq.s32.totalorder %s12, 1
      %p50 = por %p48, %p49
      %p51 = scmp.ne.s32.totalorder %s43, %s46
      %p52 = scmp.eq.s32.totalorder %s12, 0
      %p53 = por %p51, %p52
      %p54 = scmp.ne.s32.totalorder %s43, %s46
      %p55 = scmp.eq.s32.totalorder %s17, 1
      %p56 = por %p54, %p55
      %p57 = scmp.ne.s32.totalorder %s46, %s47
      %p58 = scmp.eq.s32.totalorder %s17, 0
      %p59 = por %p57, %p58
      %p60 = scmp.ne.s32.totalorder %s46, %s47
      %p61 = scmp.eq.s32.totalorder %s18, 1
      %p62 = por %p60, %p61
      %p64 = scmp.ne.s32.totalorder %s47, %s63
      %p65 = scmp.eq.s32.totalorder %s18, 0
      %p66 = por %p64, %p65
      %s67 = ssub.s32 %s21, %s30
      %p68 = scmp.eq.s32.totalorder %s67, 0
      %s70 = sadd.s32 %s69, 1
      %s71 = scalar_select %p68, %s69, %s70
      %p74 = pneg %p68
      %p75 = scmp.eq.s32.totalorder %s12, 1
      %p76 = por %p74, %p75
      %p77 = scmp.ne.s32.totalorder %s69, %s72
      %p78 = scmp.eq.s32.totalorder %s12, 0
      %p79 = por %p77, %p78
      %p80 = scmp.ne.s32.totalorder %s69, %s72
      %p81 = scmp.eq.s32.totalorder %s17, 1
      %p82 = por %p80, %p81
      %p83 = scmp.ne.s32.totalorder %s72, %s73
      %p84 = scmp.eq.s32.totalorder %s17, 0
      %p85 = por %p83, %p84
      %p86 = scmp.ne.s32.totalorder %s72, %s73
      %p87 = scmp.eq.s32.totalorder %s18, 1
      %p88 = por %p86, %p87
      %p90 = scmp.ne.s32.totalorder %s73, %s89
      %p91 = scmp.eq.s32.totalorder %s18, 0
      %p92 = por %p90, %p91
      %s93 = ssub.s32 %s21, %s30
      %p94 = scmp.eq.s32.totalorder %s93, 0
      %s96 = sadd.s32 %s95, 1
      %s97 = scalar_select %p94, %s95, %s96
      %p100 = pneg %p94
      %p101 = scmp.eq.s32.totalorder %s12, 1
      %p102 = por %p100, %p101
      %p103 = scmp.ne.s32.totalorder %s95, %s98
      %p104 = scmp.eq.s32.totalorder %s12, 0
      %p105 = por %p103, %p104
      %p106 = scmp.ne.s32.totalorder %s95, %s98
      %p107 = scmp.eq.s32.totalorder %s17, 1
      %p108 = por %p106, %p107
      %p109 = scmp.ne.s32.totalorder %s98, %s99
      %p110 = scmp.eq.s32.totalorder %s17, 0
      %p111 = por %p109, %p110
      %p112 = scmp.ne.s32.totalorder %s98, %s99
      %p113 = scmp.eq.s32.totalorder %s18, 1
      %p114 = por %p112, %p113
      %p116 = scmp.ne.s32.totalorder %s99, %s115
      %p117 = scmp.eq.s32.totalorder %s18, 0
      %p118 = por %p116, %p117
      %s119 = ssub.s32 %s20, %s34
      %s120 = ssub.s32 %s21, %s30
      %s121 = sor.u32 %s119, %s120
      %s122 = ssub.s32 %s19, %s38
      %s123 = sor.u32 %s121, %s122
      %p124 = scmp.eq.s32.totalorder %s123, 0
      %s126 = sadd.s32 %s125, 1
      %s127 = scalar_select %p124, %s125, %s126
      %p130 = pneg %p124
      %p131 = scmp.eq.s32.totalorder %s12, 1
      %p132 = por %p130, %p131
      %p133 = scmp.ne.s32.totalorder %s125, %s128
      %p134 = scmp.eq.s32.totalorder %s12, 0
      %p135 = por %p133, %p134
      %p136 = scmp.ne.s32.totalorder %s125, %s128
      %p137 = scmp.eq.s32.totalorder %s17, 1
      %p138 = por %p136, %p137
      %p139 = scmp.ne.s32.totalorder %s128, %s129
      %p140 = scmp.eq.s32.totalorder %s17, 0
      %p141 = por %p139, %p140
      %p142 = scmp.ne.s32.totalorder %s128, %s129
      %p143 = scmp.eq.s32.totalorder %s18, 1
      %p144 = por %p142, %p143
      %p146 = scmp.ne.s32.totalorder %s129, %s145
      %p147 = scmp.eq.s32.totalorder %s18, 0
      %p148 = por %p146, %p147
      %p149 = scmp.le.s32.totalorder 1, %s12
      %p150 = scmp.lt.s32.totalorder %s12, 3
      %p151 = pnand %p149, %p150
      %p152 = pneg %p151
      // Predicated region
      $region9: #{tpu_custom_call.1} parent=5 // pred_check
        _
      $region10: #{tpu_custom_call.1} parent=5 // pred_check_branch
        %154 = sbr.rel (%p151) target = $region12
      $region11: #{tpu_custom_call.1} parent=5 // pred_region
        %s155 = ssub.s32 %s12, 1
        // Predicated region
        $region13: #{tpu_custom_call.1} parent=11 // pred_check
          %p156 = pneg %p85
        $region14: #{tpu_custom_call.1} parent=11 // pred_check_branch
          %158 = sbr.rel (%p156) target = $region16
        $region15: #{tpu_custom_call.1} parent=11 // pred_region
          %p159 = scmp.lt.s32.totalorder %s24, 0
          %s160 = scalar_select %p159, %s24, 0
          %s161 = smul.addr %s160, 8
          %s162 = scalar_lea.vmem %s1, %s161
        $region16: #{tpu_custom_call.1} parent=11 // pred_fallthru
          _
        // Predicated region
        $region17: #{tpu_custom_call.1} parent=11 // pred_check
          %p163 = pneg %p111
        $region18: #{tpu_custom_call.1} parent=11 // pred_check_branch
          %165 = sbr.rel (%p163) target = $region20
        $region19: #{tpu_custom_call.1} parent=11 // pred_region
          %p166 = scmp.lt.s32.totalorder %s24, 0
          %s167 = scalar_select %p166, %s24, 0
          %s168 = smul.addr %s167, 8
          %s169 = scalar_lea.vmem %s2, %s168
        $region20: #{tpu_custom_call.1} parent=11 // pred_fallthru
          _
      $region12: #{tpu_custom_call.1} parent=5 // pred_fallthru
        _
      %p170 = scmp.lt.s32.totalorder %s12, 2
      // Predicated region
      $region21: #{tpu_custom_call.1} parent=5 // pred_check
        %p171 = pneg %p170
      $region22: #{tpu_custom_call.1} parent=5 // pred_check_branch
        %173 = sbr.rel (%p171) target = $region24
      $region23: #{tpu_custom_call.1} parent=5 // pred_region
        // Predicated region
        $region25: #{tpu_custom_call.1} parent=23 // pred_check
          %p174 = pneg %p53
        $region26: #{tpu_custom_call.1} parent=23 // pred_check_branch
          %176 = sbr.rel (%p174) target = $region28
        $region27: #{tpu_custom_call.1} parent=23 // pred_region
          %s177 = smul.u32 2, %s19
          %p178 = scmp.lt.s32.totalorder %s20, 1
          %s179 = scalar_select %p178, %s20, 1
          %p180 = scmp.lt.s32.totalorder %s177, 1
          %s181 = scalar_select %p180, %s177, 1
          %s182 = smul.addr %s179, 2
          %s183 = sadd.s32 %s181, %s182
          %s184 = smul.addr %s183, 4
          %s185 = scalar_lea.vmem %s0, %s184
          %s186 = smul.u32 2, %s19
        $region28: #{tpu_custom_call.1} parent=23 // pred_fallthru
          _
      $region24: #{tpu_custom_call.1} parent=5 // pred_fallthru
        _
      %p187 = scmp.le.s32.totalorder 1, %s12
      %p188 = scmp.lt.s32.totalorder %s12, 3
      %p189 = pnand %p187, %p188
      %p190 = pneg %p189
      // Predicated region
      $region29: #{tpu_custom_call.1} parent=5 // pred_check
        _
      $region30: #{tpu_custom_call.1} parent=5 // pred_check_branch
        %192 = sbr.rel (%p189) target = $region32
      $region31: #{tpu_custom_call.1} parent=5 // pred_region
        %s193 = ssub.s32 %s12, 1
        %s194 = smul.u32 2, %s22
        %p195 = scmp.lt.s32.totalorder %s23, 1
        %s196 = scalar_select %p195, %s23, 1
        %p197 = scmp.lt.s32.totalorder %s194, 1
        %s198 = scalar_select %p197, %s194, 1
        %s199 = smul.addr %s196, 2
        %s200 = sadd.s32 %s198, %s199
        %s201 = smul.addr %s200, 4
        %s202 = scalar_lea.vmem %s0, %s201
        %p203 = pneg %p59
        %p204 = pneg %p56
        %p205 = scmp.lt.s32.totalorder %s24, 0
        %s206 = scalar_select %p205, %s24, 0
        %s207 = smul.addr %s206, 8
        %s208 = scalar_lea.vmem %s1, %s207
        %p209 = pneg %p85
        %p210 = pneg %p82
        %p211 = scmp.lt.s32.totalorder %s24, 0
        %s212 = scalar_select %p211, %s24, 0
        %s213 = smul.addr %s212, 8
        %s214 = scalar_lea.vmem %s2, %s213
        %p215 = pneg %p111
        %p216 = pneg %p108
        %p217 = pneg %p141
        %p218 = pneg %p138
        %s219 = sand.u32 %s128, 1
        %s220 = scalar_lea.sflag [#allocation3], %s219
        %s221 = sand.u32 %s128, 1
        %s222 = smul.addr %s221, 16
        %s223 = scalar_lea.vmem [#allocation2], %s222
        %s224 = smul.u32 2, %s22
        %p225 = scmp.lt.s32.totalorder %s23, 1
        %s226 = scalar_select %p225, %s23, 1
        %p227 = scmp.lt.s32.totalorder %s224, 1
        %s228 = scalar_select %p227, %s224, 1
        %s229 = smul.addr %s226, 2
        %s230 = sadd.s32 %s228, %s229
        %s231 = smul.addr %s230, 4
        %s232 = scalar_lea.vmem %s0, %s231
        %s233 = smul.u32 2, %s22
        %p234 = scmp.lt.s32.totalorder %s24, 0
        %s235 = scalar_select %p234, %s24, 0
        %s236 = smul.addr %s235, 8
        %s237 = scalar_lea.vmem %s1, %s236
        %p238 = scmp.lt.s32.totalorder %s24, 0
        %s239 = scalar_select %p238, %s24, 0
        %s240 = smul.addr %s239, 8
        %s241 = scalar_lea.vmem %s2, %s240
        %s242 = smul.u32 2, %s22
        %v243 = vld [vmem:[%s232] sm:$0xff]
        %v244 = vld [vmem:[%s237] sm:$0xff]
        %v245 = vld [vmem:[%s241] sm:$0xff]
        %247 = vset.pattern.permute.xlu0 0
        %248 = vperm.xlu0 %247, %v245
        %v249 = vpop.permute.xlu0 %248
        %v252 = vcombine.high %v243, %v243
        %vm253 = vcmask 31744
        %v255 = vsel %vm253, %v244, 0
        %vm257 = vcmask 1043456
        %v258 = vsel %vm257, %v243, 0
        %v260 = vsel %vm257, %v252, 0
        %262 = vmatprep.subr.mxu0 %v260
        %263 = vmatpush1.msra.mxu0 %v258
        %264 = vmatprep.subr.mxu0 0.0
        %265 = vmatpush1.msra.mxu0 0.0
        %266 = vmatprep.subr.mxu0 0.0
        %267 = vmatpush1.msra.mxu0 0.0
        %268 = vmatprep.subr.mxu0 0.0
        %269 = vmatpush1.msra.mxu0 0.0
        %270 = vmatprep.subr.mxu0 0.0
        %271 = vmatpush1.msra.mxu0 0.0
        %272 = vmatprep.subr.mxu0 0.0
        %273 = vmatpush1.msra.mxu0 0.0
        %274 = vmatprep.subr.mxu0 0.0
        %275 = vmatpush1.msra.mxu0 0.0
        %276 = vmatprep.subr.mxu0 0.0
        %277 = vmatpush1.msra.mxu0 0.0
        %278 = vmatprep.subr.mxu0 0.0
        %279 = vmatpush1.msra.mxu0 0.0
        %280 = vmatprep.subr.mxu0 0.0
        %281 = vmatpush1.msra.mxu0 0.0
        %282 = vmatprep.subr.mxu0 0.0
        %283 = vmatpush1.msra.mxu0 0.0
        %284 = vmatprep.subr.mxu0 0.0
        %285 = vmatpush1.msra.mxu0 0.0
        %286 = vmatprep.subr.mxu0 0.0
        %287 = vmatpush1.msra.mxu0 0.0
        %288 = vmatprep.subr.mxu0 0.0
        %289 = vmatpush1.msra.mxu0 0.0
        %290 = vmatprep.subr.mxu0 0.0
        %291 = vmatpush1.msra.mxu0 0.0
        %292 = vmatprep.subr.mxu0 0.0
        %293 = vmatpush1.msra.mxu0 0.0
        %294 = vmatprep.subr.mxu0 0.0
        %295 = vmatpush1.msra.mxu0 0.0
        %296 = vmatprep.subr.mxu0 0.0
        %297 = vmatpush1.msra.mxu0 0.0
        %298 = vmatprep.subr.mxu0 0.0
        %299 = vmatpush1.msra.mxu0 0.0
        %300 = vmatprep.subr.mxu0 0.0
        %301 = vmatpush1.msra.mxu0 0.0
        %302 = vmatprep.subr.mxu0 0.0
        %303 = vmatpush1.msra.mxu0 0.0
        %304 = vmatprep.subr.mxu0 0.0
        %305 = vmatpush1.msra.mxu0 0.0
        %306 = vmatprep.subr.mxu0 0.0
        %307 = vmatpush1.msra.mxu0 0.0
        %308 = vmatprep.subr.mxu0 0.0
        %309 = vmatpush1.msra.mxu0 0.0
        %310 = vmatprep.subr.mxu0 0.0
        %311 = vmatpush1.msra.mxu0 0.0
        %312 = vmatprep.subr.mxu0 0.0
        %313 = vmatpush1.msra.mxu0 0.0
        %314 = vmatprep.subr.mxu0 0.0
        %315 = vmatpush1.msra.mxu0 0.0
        %316 = vmatprep.subr.mxu0 0.0
        %317 = vmatpush1.msra.mxu0 0.0
        %318 = vmatprep.subr.mxu0 0.0
        %319 = vmatpush1.msra.mxu0 0.0
        %320 = vmatprep.subr.mxu0 0.0
        %321 = vmatpush1.msra.mxu0 0.0
        %322 = vmatprep.subr.mxu0 0.0
        %323 = vmatpush1.msra.mxu0 0.0
        %324 = vmatprep.subr.mxu0 0.0
        %325 = vmatpush1.msra.mxu0 0.0
        %326 = vmatprep.mubr.f32.mxu0 0.0
        %327 = vmatmul.mubr.f32.gmra.mrb[0].mxu0 %v255
        %v328 = vpop.f32.mrb[0].mxu0
        %v329 = vadd.f32 %v249, %v328
        %v330 = vpop.f32.mrb[0].mxu0
        %v331 = vadd.f32 %v249, %v330
        %332 = vdwg.mxu0
        %333 = vst [vmem:[%s223] sm:$0xff] %v329
        %334 = vst [vmem:[%s223 + $0x8] sm:$0xff] %v331
        %s335 = sand.u32 %s128, 1
        %s336 = scalar_lea.sflag [#allocation3], %s335
        %s337 = sand.u32 %s128, 1
        %s338 = smul.addr %s337, 16
        %s339 = scalar_lea.vmem [#allocation2], %s338
        // Predicated region
        $region33: #{tpu_custom_call.1} parent=31 // pred_check
          %p340 = pneg %p138
        $region34: #{tpu_custom_call.1} parent=31 // pred_check_branch
          %342 = sbr.rel (%p340) target = $region36
        $region35: #{tpu_custom_call.1} parent=31 // pred_region
          %s343 = smul.u32 2, %s22
          %s345 = ssub.s32 256, 256
          %346 = vsyncadd %s336, %s345
          %s347 = smul.addr %s24, 2
          %s348 = sadd.s32 %s343, %s347
          %s349 = smul.addr %s23, 2
          %s350 = sadd.s32 %s348, %s349
          %s351 = smul.addr %s350, 128
          %s352 = scalar_lea.hbm %s3, %s351
          %s354 = sshll.u32 %s339, 4
          %s355 = int_to_ptr.vmem [resolvable:$true] %s354
          %357 = dma.vmem_to_hbm [thread:$0]  %s355, 256, %s352, %s336
        $region36: #{tpu_custom_call.1} parent=31 // pred_fallthru
          _
      $region32: #{tpu_custom_call.1} parent=5 // pred_fallthru
        _
      %p358 = scmp.le.s32.totalorder 2, %s12
      // Predicated region
      $region37: #{tpu_custom_call.1} parent=5 // pred_check
        %p359 = pneg %p358
      $region38: #{tpu_custom_call.1} parent=5 // pred_check_branch
        %361 = sbr.rel (%p359) target = $region40
      $region39: #{tpu_custom_call.1} parent=5 // pred_region
        %s362 = ssub.s32 %s12, 2
        // Predicated region
        $region41: #{tpu_custom_call.1} parent=39 // pred_check
          %p363 = pneg %p144
        $region42: #{tpu_custom_call.1} parent=39 // pred_check_branch
          %365 = sbr.rel (%p363) target = $region44
        $region43: #{tpu_custom_call.1} parent=39 // pred_region
          %s366 = sand.u32 %s129, 1
          %s367 = scalar_lea.sflag [#allocation3], %s366
          %s368 = sand.u32 %s129, 1
          %s369 = smul.addr %s368, 16
          %s370 = scalar_lea.vmem [#allocation2], %s369
          %371 = dma.done %s367, 256
        $region44: #{tpu_custom_call.1} parent=39 // pred_fallthru
          _
      $region40: #{tpu_custom_call.1} parent=5 // pred_fallthru
        _
    $region6: #{tpu_custom_call.1} parent=1 // loop_footer
      %s16 = sadd.s32 1, %s12
    $region7: #{tpu_custom_call.1} parent=1 // loop_footer_branch
      %11 = sbr.rel target = $region3
    $region8: #{tpu_custom_call.1} parent=1 // loop_exit
      _
    %372 = vsyncpa [#allocation3], 1
    %s373 = scalar_lea.sflag [#allocation3], 1
    %374 = vsyncpa %s373, 1

</llo_original>
